<compile_context>
chip_gen: v5e
topology: v5e:2x2
jax: 0.10.0
libtpu: 0.0.40
codegen_flags: <defaults>
</compile_context>

<pallas_src>
import functools

import numpy as np
import jax
import jax.numpy as jnp
from jax.experimental import pallas as pl
from jax.experimental.pallas import tpu as pltpu

_LEAKY_SLOPE = 0.1
_BN_EPS = 1e-5
_VMEM_LIMIT_BYTES = 48 * 1024 * 1024   # sized below v7x's 64 MiB physical VMEM

# 13-tap Gaussian kernel, sigma=3 (kornia get_gaussian_kernel1d(13, 3.0)).
_gx = np.arange(13, dtype=np.float64) - 6.0
_g = np.exp(-(_gx ** 2) / (2.0 * 3.0 ** 2))
_G13 = tuple(float(v) for v in (_g / _g.sum()))


def _cparams():
    return pltpu.CompilerParams(
        dimension_semantics=("parallel", "parallel"),
        vmem_limit_bytes=_VMEM_LIMIT_BYTES)


def _tile_h(H):
    return 8 if H % 8 == 0 else H


# ---------------------------------------------------------------------------
# 3x3 (bias-free, stride 1, padding=dilation) conv.
# The padded NHWC image for the current batch element stays resident in VMEM
# (its block index only depends on the batch grid axis); each H-tile gathers
# its 9 taps in-kernel, concatenates them along lanes and issues ONE matmul of
# contraction depth 9*Cin.  LeakyReLU is fused when there is no BatchNorm;
# with BatchNorm the kernel also emits per-tile (sum, sum-of-squares) partials.
# ---------------------------------------------------------------------------
def _conv3x3_kernel(x_ref, w_ref, o_ref, *opt, tile_h, width, dil, cin, cout,
                    do_bn, do_act):
    t = pl.program_id(1)
    row0 = pl.multiple_of(t * tile_h, tile_h)

    taps = []
    for ky in range(3):
        rows = x_ref[0, pl.ds(row0 + ky * dil, tile_h), :, :]      # (th, Wp, Cin)
        for kx in range(3):
            taps.append(rows[:, kx * dil:kx * dil + width, :])     # (th, W, Cin)
    lhs = jnp.concatenate(taps, axis=-1)                           # (th, W, 9*Cin)
    lhs = lhs.reshape(tile_h * width, 9 * cin)

    y = jnp.dot(lhs, w_ref[...], preferred_element_type=jnp.float32)  # (th*W, Cout)

    if do_act and not do_bn:
        y = jnp.where(y >= 0.0, y, _LEAKY_SLOPE * y)

    o_ref[0, :, :, :] = y.reshape(tile_h, width, cout)

    if do_bn:
        s_ref = opt[0]                                             # (1, 1, 2, Cout)
        s_ref[0, 0, 0:1, :] = jnp.sum(y, axis=0, keepdims=True)
        s_ref[0, 0, 1:2, :] = jnp.sum(y * y, axis=0, keepdims=True)


def _bn_act_kernel(x_ref, p_ref, o_ref, *, do_act):
    x = x_ref[...]                       # (1, th, W, C)
    mean = p_ref[0:1, :]                 # (1, C)
    invstd = p_ref[1:2, :]               # (1, C)
    y = (x - mean) * invstd
    if do_act:
        y = jnp.where(y >= 0.0, y, _LEAKY_SLOPE * y)
    o_ref[...] = y


def conv2d_3x3(x, w_flat, *, dilation=1, do_bn=False, do_act=True):
    """3x3 conv (NHWC, padding=dilation).  w_flat rows ordered (ky, kx, ci)."""
    B, H, W, Cin = x.shape
    Cout = w_flat.shape[1]
    pad = dilation
    xp = jnp.pad(x, ((0, 0), (pad, pad), (pad, pad), (0, 0)))
    Hp, Wp = H + 2 * pad, W + 2 * pad
    th = _tile_h(H)
    n_h = H // th

    kern = functools.partial(_conv3x3_kernel, tile_h=th, width=W, dil=dilation,
                             cin=Cin, cout=Cout, do_bn=do_bn, do_act=do_act)
    in_specs = [pl.BlockSpec((1, Hp, Wp, Cin), lambda b, t: (b, 0, 0, 0)),
                pl.BlockSpec((9 * Cin, Cout), lambda b, t: (0, 0))]
    o_shapes = [jax.ShapeDtypeStruct((B, H, W, Cout), jnp.float32)]
    o_specs = [pl.BlockSpec((1, th, W, Cout), lambda b, t: (b, t, 0, 0))]
    if do_bn:
        o_shapes.append(jax.ShapeDtypeStruct((B, n_h, 2, Cout), jnp.float32))
        o_specs.append(pl.BlockSpec((1, 1, 2, Cout), lambda b, t: (b, t, 0, 0)))

    res = pl.pallas_call(
        kern,
        grid=(B, n_h),
        in_specs=in_specs,
        out_specs=tuple(o_specs) if do_bn else o_specs[0],
        out_shape=tuple(o_shapes) if do_bn else o_shapes[0],
        compiler_params=_cparams(),
    )(xp, w_flat)

    if not do_bn:
        return res

    raw, stats = res
    m_total = float(B * H * W)
    sums = jnp.sum(stats, axis=(0, 1))                       # (2, Cout)
    mean = sums[0] / m_total
    var = jnp.maximum(sums[1] / m_total - mean * mean, 0.0)  # biased var (BN train)
    invstd = jax.lax.rsqrt(var + _BN_EPS)
    params = jnp.stack([mean, invstd], axis=0)               # (2, Cout)

    return pl.pallas_call(
        functools.partial(_bn_act_kernel, do_act=do_act),
        grid=(B, n_h),
        in_specs=[pl.BlockSpec((1, th, W, Cout), lambda b, t: (b, t, 0, 0)),
                  pl.BlockSpec((2, Cout), lambda b, t: (0, 0))],
        out_specs=pl.BlockSpec((1, th, W, Cout), lambda b, t: (b, t, 0, 0)),
        out_shape=jax.ShapeDtypeStruct((B, H, W, Cout), jnp.float32),
        compiler_params=_cparams(),
    )(raw, params)
    # TODO(synk): bf16 MXU operands (v6e/v7x) would be faster but drift from the
    # f32 PyTorch reference; kept in f32.


# ---------------------------------------------------------------------------
# 13x13 separable Gaussian blur (sigma=3).  Works in (B, H, C, W) layout:
#   - vertical taps: dynamic slices along the untiled H (major) dim,
#   - horizontal taps: static lane-dim windows (W on lanes -> lane-dense VPU).
# Optionally fuses clamp(-300,300) + per-channel /scale (final disp blur) and
# the channel-mean of the squared output (needed once by localcorr).
# ---------------------------------------------------------------------------
def _blur13_kernel(x_ref, o_ref, *opt, tile_h, width, final, with_sq, sw, sh):
    t = pl.program_id(1)
    row0 = pl.multiple_of(t * tile_h, tile_h)

    vert = _G13[0] * x_ref[0, pl.ds(row0, tile_h), :, :]           # (th, C, Wp)
    for ky in range(1, 13):
        vert = vert + _G13[ky] * x_ref[0, pl.ds(row0 + ky, tile_h), :, :]

    out = _G13[0] * vert[:, :, 0:width]                            # (th, C, W)
    for kx in range(1, 13):
        out = out + _G13[kx] * vert[:, :, kx:kx + width]

    if final:
        out = jnp.clip(out, -300.0, 300.0)
        ch = jax.lax.broadcasted_iota(jnp.int32, out.shape, 1)
        out = out / jnp.where(ch == 0, sw, sh)                     # ch0/(w-1), ch1/(h-1)

    o_ref[0, :, :, :] = out

    if with_sq:
        opt[0][0, :, :] = jnp.mean(out * out, axis=1)              # (th, W)


def gaussian_blur13(x_nhwc, *, border, final=False, with_sq=False, sw=1.0, sh=1.0):
    """Returns blurred map in (B, H, C, W) layout (+ optional mean_c(blur^2))."""
    B, H, W, C = x_nhwc.shape
    xt = jnp.transpose(x_nhwc, (0, 1, 3, 2))                       # (B, H, C, W)
    mode = "constant" if border == "constant" else "edge"          # replicate -> edge
    xp = jnp.pad(xt, ((0, 0), (6, 6), (0, 0), (6, 6)), mode=mode)  # (B, H+12, C, W+12)
    Hp, Wp = H + 12, W + 12
    th = _tile_h(H)
    n_h = H // th

    kern = functools.partial(_blur13_kernel, tile_h=th, width=W, final=final,
                             with_sq=with_sq, sw=float(sw), sh=float(sh))
    o_shapes = [jax.ShapeDtypeStruct((B, H, C, W), jnp.float32)]
    o_specs = [pl.BlockSpec((1, th, C, W), lambda b, t: (b, t, 0, 0))]
    if with_sq:
        o_shapes.append(jax.ShapeDtypeStruct((B, H, W), jnp.float32))
        o_specs.append(pl.BlockSpec((1, th, W), lambda b, t: (b, t, 0)))

    return pl.pallas_call(
        kern,
        grid=(B, n_h),
        in_specs=[pl.BlockSpec((1, Hp, C, Wp), lambda b, t: (b, 0, 0, 0))],
        out_specs=tuple(o_specs) if with_sq else o_specs[0],
        out_shape=tuple(o_shapes) if with_sq else o_shapes[0],
        compiler_params=_cparams(),
    )(xp)


# ---------------------------------------------------------------------------
# Local correlation: unfold(k=7, dilation=4, padding=12) equivalent, expanded as
#   mean_c(f2 - sl)^2 = mean_c f2^2 + mean_c sl^2 - 2*mean_c(f2*sl)
# mean_c f2^2 is computed once per tile, mean_c f1s^2 is precomputed once (by
# the blur kernel) on the padded map and only sliced per tap; only the 49
# cross-term channel reductions remain.  Output (B, 49, H, W): W on lanes,
# full-width stores per tap.
# ---------------------------------------------------------------------------
def _localcorr_kernel(f2_ref, f1p_ref, sq_ref, o_ref, *, tile_h, width, ks, dil, cin):
    t = pl.program_id(1)
    row0 = pl.multiple_of(t * tile_h, tile_h)
    inv_c = 1.0 / cin

    f2 = f2_ref[0]                                                 # (th, C, W)
    a = jnp.sum(f2 * f2, axis=1) * inv_c                           # (th, W)

    for ky in range(ks):
        rows = f1p_ref[0, pl.ds(row0 + ky * dil, tile_h), :, :]    # (th, C, Wp)
        sqrow = sq_ref[0, pl.ds(row0 + ky * dil, tile_h), :]       # (th, Wp)
        for kx in range(ks):
            sl = rows[:, :, kx * dil:kx * dil + width]             # (th, C, W)
            cross = jnp.sum(f2 * sl, axis=1) * inv_c               # (th, W)
            bterm = sqrow[:, kx * dil:kx * dil + width]            # (th, W)
            o_ref[0, ky * ks + kx, :, :] = a + bterm - 2.0 * cross


def localcorr_map(f2p_nhwc, f1s_hcw, f1s_sqmean, *, ks=7, dil=4):
    B, H, W, C = f2p_nhwc.shape
    padn = 2 * (ks - 1)                                            # 12, zero pad (F.unfold)
    f2t = jnp.transpose(f2p_nhwc, (0, 1, 3, 2))                    # (B, H, C, W)
    f1p = jnp.pad(f1s_hcw, ((0, 0), (padn, padn), (0, 0), (padn, padn)))
    sqp = jnp.pad(f1s_sqmean, ((0, 0), (padn, padn), (padn, padn)))
    Hp, Wp = H + 2 * padn, W + 2 * padn
    th = _tile_h(H)
    n_h = H // th

    kern = functools.partial(_localcorr_kernel, tile_h=th, width=W,
                             ks=ks, dil=dil, cin=C)
    return pl.pallas_call(
        kern,
        grid=(B, n_h),
        in_specs=[pl.BlockSpec((1, th, C, W), lambda b, t: (b, t, 0, 0)),
                  pl.BlockSpec((1, Hp, C, Wp), lambda b, t: (b, 0, 0, 0)),
                  pl.BlockSpec((1, Hp, Wp), lambda b, t: (b, 0, 0))],
        out_specs=pl.BlockSpec((1, ks * ks, th, W), lambda b, t: (b, 0, t, 0)),
        out_shape=jax.ShapeDtypeStruct((B, ks * ks, H, W), jnp.float32),
        compiler_params=_cparams(),
    )(f2t, f1p, sqp)


# ---------------------------------------------------------------------------
# DispEstimator
# ---------------------------------------------------------------------------
class DispEstimatorPallas:
    def __init__(self, channel, depth=4, dilation=1, *, key):
        self.channel = channel
        self.corrks = 7
        self.pre_dilation = dilation
        keys = jax.random.split(key, 3 + depth)

        def wconv(k, cin, cout, ksize=3):
            fan_in = ksize * ksize * cin
            w = jax.random.normal(k, (ksize * ksize * cin, cout), jnp.float32)
            return (w / np.sqrt(fan_in)).astype(jnp.float32)

        c = channel
        self.w_pre = wconv(keys[0], c, c)            # preprocessor (no norm/act)
        self.w_fc1 = wconv(keys[1], 2 * c, 2 * c)    # featcompressor conv1 (LeakyReLU)
        self.w_fc2 = wconv(keys[2], 2 * c, c)        # featcompressor conv2 (no act)

        specs = []
        ic = c + self.corrks ** 2
        oc = c
        d = 1
        for _ in range(depth - 1):
            oc = oc // 2
            specs.append(dict(cin=ic, cout=oc, dilation=d, do_bn=True, do_act=True))
            ic = oc
            d *= 2
        specs.append(dict(cin=oc, cout=2, dilation=1, do_bn=False, do_act=False))
        self.est_specs = specs
        self.est_w = [wconv(keys[3 + i], s["cin"], s["cout"])
                      for i, s in enumerate(specs)]

    def __call__(self, feat1, feat2):
        b, c, h, w = feat1.shape
        f1 = jnp.transpose(feat1, (0, 2, 3, 1)).astype(jnp.float32)
        f2 = jnp.transpose(feat2, (0, 2, 3, 1)).astype(jnp.float32)

        # preprocessor over batch-concatenated features (torch.cat dim=0)
        feat = jnp.concatenate([f1, f2], axis=0)
        feat = conv2d_3x3(feat, self.w_pre, dilation=self.pre_dilation,
                          do_bn=False, do_act=False)
        f1p, f2p = feat[:b], feat[b:]

        # featcompressor
        fc = conv2d_3x3(jnp.concatenate([f1p, f2p], axis=-1), self.w_fc1,
                        dilation=1, do_bn=False, do_act=True)
        fc = conv2d_3x3(fc, self.w_fc2, dilation=1, do_bn=False, do_act=False)

        # local correlation (blur also emits the channel-mean square map)
        f1s, f1s_sq = gaussian_blur13(f1p, border="constant", with_sq=True)
        lc = localcorr_map(f2p, f1s, f1s_sq, ks=self.corrks, dil=4)  # (B, 49, H, W)
        corr = jnp.concatenate([fc, jnp.transpose(lc, (0, 2, 3, 1))], axis=-1)

        # estimator stack (BN layers use the two-pass conv+stats / normalize path)
        for spec, wgt in zip(self.est_specs, self.est_w):
            corr = conv2d_3x3(corr, wgt, dilation=spec["dilation"],
                              do_bn=spec["do_bn"], do_act=spec["do_act"])

        # final blur (replicate border) + clamp + per-channel scale, fused in-kernel
        disp = gaussian_blur13(corr, border="replicate", final=True,
                               sw=float(w - 1), sh=float(h - 1))     # (B, H, 2, W)
        return jnp.transpose(disp, (0, 2, 1, 3))                     # (B, 2, H, W)
        # TODO(synk): BatchNorm running-stat (momentum) buffer updates are a stateful
        # training side effect with no output contribution; not modeled.


if __name__ == "__main__":
    root = jax.random.PRNGKey(0)
    k1, k2, kp = jax.random.split(root, 3)
    B, C, H, W = 2, 16, 16, 16
    feat1 = jax.random.normal(k1, (B, C, H, W), jnp.float32)
    feat2 = jax.random.normal(k2, (B, C, H, W), jnp.float32)

    model = DispEstimatorPallas(C, depth=4, dilation=1, key=kp)
    disp = jax.block_until_ready(model(feat1, feat2))

    assert disp.shape == (B, 2, H, W), disp.shape
    assert disp.dtype == jnp.float32
    assert bool(jnp.all(jnp.isfinite(disp)))
    print("KERNEL_OK")
</pallas_src>

<mosaic_0001>
module attributes {stable_mosaic.version = 11 : i64} {
  func.func @_conv3x3_kernel(%arg0: i32, %arg1: i32, %arg2: memref<1x18x18x16xf32, #tpu.memory_space<vmem>>, %arg3: memref<144x16xf32, #tpu.memory_space<vmem>>, %arg4: memref<1x8x16x16xf32, #tpu.memory_space<vmem>>) attributes {dimension_semantics = [#tpu.dimension_semantics<parallel>, #tpu.dimension_semantics<parallel>], iteration_bounds = array<i64: 4, 2>, scalar_prefetch = 0 : i64, scratch_operands = 0 : i64, tpu.core_type = #tpu.core_type<tc>, window_params = [{transform_indices = @transform_0, window_bounds = array<i64: 1, 18, 18, 16>}, {pipeline_mode = #tpu.pipeline_mode<synchronous>, transform_indices = @transform_1, window_bounds = array<i64: 144, 16>}, {transform_indices = @transform_2, window_bounds = array<i64: 1, 8, 16, 16>}]} {
    %c8_i32 = arith.constant 8 : i32
    %0 = arith.muli %arg1, %c8_i32 : i32
    %1 = tpu.assume_multiple %0, 8 : i32
    %c0_i32 = arith.constant 0 : i32
    %2 = arith.addi %1, %c0_i32 : i32
    %c0 = arith.constant 0 : index
    %3 = arith.index_cast %2 : i32 to index
    %c0_0 = arith.constant 0 : index
    %c0_1 = arith.constant 0 : index
    %4 = vector.load %arg2[%c0, %3, %c0_0, %c0_1] : memref<1x18x18x16xf32, #tpu.memory_space<vmem>>, vector<1x8x18x16xf32>
    %5 = vector.shape_cast %4 : vector<1x8x18x16xf32> to vector<8x18x16xf32>
    %6 = vector.extract_strided_slice %5 {offsets = [0, 0, 0], sizes = [8, 16, 16], strides = [1, 1, 1]} : vector<8x18x16xf32> to vector<8x16x16xf32>
    %7 = vector.extract_strided_slice %5 {offsets = [0, 1, 0], sizes = [8, 16, 16], strides = [1, 1, 1]} : vector<8x18x16xf32> to vector<8x16x16xf32>
    %8 = vector.extract_strided_slice %5 {offsets = [0, 2, 0], sizes = [8, 16, 16], strides = [1, 1, 1]} : vector<8x18x16xf32> to vector<8x16x16xf32>
    %c1_i32 = arith.constant 1 : i32
    %9 = arith.addi %1, %c1_i32 : i32
    %c0_2 = arith.constant 0 : index
    %10 = arith.index_cast %9 : i32 to index
    %c0_3 = arith.constant 0 : index
    %c0_4 = arith.constant 0 : index
    %11 = vector.load %arg2[%c0_2, %10, %c0_3, %c0_4] : memref<1x18x18x16xf32, #tpu.memory_space<vmem>>, vector<1x8x18x16xf32>
    %12 = vector.shape_cast %11 : vector<1x8x18x16xf32> to vector<8x18x16xf32>
    %13 = vector.extract_strided_slice %12 {offsets = [0, 0, 0], sizes = [8, 16, 16], strides = [1, 1, 1]} : vector<8x18x16xf32> to vector<8x16x16xf32>
    %14 = vector.extract_strided_slice %12 {offsets = [0, 1, 0], sizes = [8, 16, 16], strides = [1, 1, 1]} : vector<8x18x16xf32> to vector<8x16x16xf32>
    %15 = vector.extract_strided_slice %12 {offsets = [0, 2, 0], sizes = [8, 16, 16], strides = [1, 1, 1]} : vector<8x18x16xf32> to vector<8x16x16xf32>
    %c2_i32 = arith.constant 2 : i32
    %16 = arith.addi %1, %c2_i32 : i32
    %c0_5 = arith.constant 0 : index
    %17 = arith.index_cast %16 : i32 to index
    %c0_6 = arith.constant 0 : index
    %c0_7 = arith.constant 0 : index
    %18 = vector.load %arg2[%c0_5, %17, %c0_6, %c0_7] : memref<1x18x18x16xf32, #tpu.memory_space<vmem>>, vector<1x8x18x16xf32>
    %19 = vector.shape_cast %18 : vector<1x8x18x16xf32> to vector<8x18x16xf32>
    %20 = vector.extract_strided_slice %19 {offsets = [0, 0, 0], sizes = [8, 16, 16], strides = [1, 1, 1]} : vector<8x18x16xf32> to vector<8x16x16xf32>
    %21 = vector.extract_strided_slice %19 {offsets = [0, 1, 0], sizes = [8, 16, 16], strides = [1, 1, 1]} : vector<8x18x16xf32> to vector<8x16x16xf32>
    %22 = vector.extract_strided_slice %19 {offsets = [0, 2, 0], sizes = [8, 16, 16], strides = [1, 1, 1]} : vector<8x18x16xf32> to vector<8x16x16xf32>
    %23 = tpu.concatenate %6, %7, %8, %13, %14, %15, %20, %21, %22 in 2 : vector<8x16x16xf32>, vector<8x16x16xf32>, vector<8x16x16xf32>, vector<8x16x16xf32>, vector<8x16x16xf32>, vector<8x16x16xf32>, vector<8x16x16xf32>, vector<8x16x16xf32>, vector<8x16x16xf32> -> vector<8x16x144xf32>
    %24 = vector.shape_cast %23 : vector<8x16x144xf32> to vector<128x144xf32>
    %c0_8 = arith.constant 0 : index
    %c0_9 = arith.constant 0 : index
    %25 = vector.load %arg3[%c0_8, %c0_9] : memref<144x16xf32, #tpu.memory_space<vmem>>, vector<144x16xf32>
    %cst = arith.constant dense<0.000000e+00> : vector<128x16xf32>
    %26 = tpu.matmul %24, %25, %cst {dimension_numbers = #tpu.dot_dimension_numbers<[1], [0], [0], [1], [0, 0, 1, 1], [], []>} : vector<128x144xf32>, vector<144x16xf32>, vector<128x16xf32> -> vector<128x16xf32>
    %27 = vector.shape_cast %26 : vector<128x16xf32> to vector<8x16x16xf32>
    %c0_10 = arith.constant 0 : index
    %c0_11 = arith.constant 0 : index
    %c0_12 = arith.constant 0 : index
    %c0_13 = arith.constant 0 : index
    %28 = vector.load %arg4[%c0_10, %c0_11, %c0_12, %c0_13] : memref<1x8x16x16xf32, #tpu.memory_space<vmem>>, vector<1x8x16x16xf32>
    %29 = vector.shape_cast %28 : vector<1x8x16x16xf32> to vector<8x16x16xf32>
    %30 = vector.shape_cast %27 : vector<8x16x16xf32> to vector<1x8x16x16xf32>
    tpu.vector_store %arg4[%c0_10, %c0_11, %c0_12, %c0_13], %30 {strides = array<i32>} : memref<1x8x16x16xf32, #tpu.memory_space<vmem>>, vector<1x8x16x16xf32>,
    return
  }
  func.func @transform_0(%arg0: i32, %arg1: i32) -> (i32, i32, i32, i32) {
    %c0_i32 = arith.constant 0 : i32
    %c0_i32_0 = arith.constant 0 : i32
    %c0_i32_1 = arith.constant 0 : i32
    %c0_i32_2 = arith.constant 0 : i32
    return %arg0, %c0_i32, %c0_i32_0, %c0_i32_1 : i32, i32, i32, i32
  }
  func.func @transform_1(%arg0: i32, %arg1: i32) -> (i32, i32) {
    %c0_i32 = arith.constant 0 : i32
    %c0_i32_0 = arith.constant 0 : i32
    %c0_i32_1 = arith.constant 0 : i32
    return %c0_i32, %c0_i32_0 : i32, i32
  }
  func.func @transform_2(%arg0: i32, %arg1: i32) -> (i32, i32, i32, i32) {
    %c0_i32 = arith.constant 0 : i32
    %c0_i32_0 = arith.constant 0 : i32
    %c0_i32_1 = arith.constant 0 : i32
    return %arg0, %arg1, %c0_i32, %c0_i32_0 : i32, i32, i32, i32
  }
}

</mosaic_0001>

<llo_original>
// kernel: tpu_custom_call.1
$region0: #{tpu_custom_call.1}
  #allocation0 [shape = 'u32[]', space=smem, size = 0x4, offset = 0x4, fixed_abs, tag = 'smem constant byte address 0x4 - core index']
  #allocation1 [shape = 'u32[72,128]{1,0:T(1,128)}', space=vmem, size = 0x9000, scoped, tag = 'internal scratch']
  %s0 = inlined_call_operand.vmem [shape: f32[4,18,18,16], index: 0, kind: input, shape index: {}]
  %s1 = inlined_call_operand.vmem [shape: f32[144,16], index: 1, kind: input, shape index: {}]
  %s2 = inlined_call_operand.hbm [shape: f32[4,16,16,16], index: 2, kind: output, shape index: {}]
  %s3 = sld [smem:[#allocation0]]
  $region41: #{tpu_custom_call.1} parent=0
    _
  %s5 = ssub.s32 1, %s3
  %s6 = scalar_select 0, %s5, %s3
  $region1: #{tpu_custom_call.1} parent=0
    #allocation2 [shape = 'u8[131072]{0}', space=vmem, size = 0x20000, scoped, tag = 'output window, operand 0']
    #allocation3 [shape = 's32[2]{0}', space=sflag, size = 0x8, scoped, tag = 'scoped memory for tpu_custom_call.1']
    %7 = vsyncpa [#allocation3], 0
    %s8 = scalar_lea.sflag [#allocation3], 1
    %9 = vsyncpa %s8, 0
    loop: start=0, step=1, limit=10
    $region2: #{tpu_custom_call.1} parent=1 // loop_pre_header
      _
    $region3: #{tpu_custom_call.1} parent=1 // loop_header
      %s11 = sphi 0, %s15
      %p12 = scmp.ge.s32.totalorder %s11, 10
      %s18 = sphi 0, %s30
      %s19 = sphi 0, %s26
      %s20 = sphi 0, %s18
      %s21 = sphi 0, %s19
      %s22 = sphi 0, %s20
      %s23 = sphi 0, %s21
      %s33 = sphi 0, %s35
      %s36 = sphi 0, %s33
      %s37 = sphi 0, %s36
      %s53 = sphi 0, %s37
      %s57 = sphi 0, %s57
      %s59 = sphi 0, %s57
      %s60 = sphi 0, %s59
      %s74 = sphi 0, %s60
      %s82 = sphi 0, %s84
      %s85 = sphi 0, %s82
      %s86 = sphi 0, %s85
      %s102 = sphi 0, %s86
    $region4: #{tpu_custom_call.1} parent=1 // loop_header_branch
      %14 = sbr.rel (%p12) target = $region8
    $region5: #{tpu_custom_call.1} parent=1 // loop_body
      %s16 = ssub.s32 %s11, 1
      %s17 = ssub.s32 %s11, 2
      %s24 = sadd.s32 1, %s19
      %p25 = scmp.ge.s32.totalorder %s24, 2
      %s26 = scalar_select %p25, 0, %s24
      %s27 = sadd.s32 1, %s18
      %s28 = scalar_select %p25, %s27, %s18
      %p29 = scmp.ge.s32.totalorder %s28, 4
      %s30 = scalar_select %p29, 0, %s28
      %s31 = ssub.s32 %s18, %s30
      %p32 = scmp.eq.s32.totalorder %s31, 0
      %s34 = sadd.s32 %s33, 1
      %s35 = scalar_select %p32, %s33, %s34
      %p38 = pneg %p32
      %p39 = scmp.eq.s32.totalorder %s11, 7
      %p40 = por %p38, %p39
      %p41 = scmp.ne.s32.totalorder %s33, %s36
      %p42 = scmp.eq.s32.totalorder %s11, 0
      %p43 = por %p41, %p42
      %p44 = scmp.ne.s32.totalorder %s33, %s36
      %p45 = scmp.eq.s32.totalorder %s16, 7
      %p46 = por %p44, %p45
      %p47 = scmp.ne.s32.totalorder %s36, %s37
      %p48 = scmp.eq.s32.totalorder %s16, 0
      %p49 = por %p47, %p48
      %p50 = scmp.ne.s32.totalorder %s36, %s37
      %p51 = scmp.eq.s32.totalorder %s17, 7
      %p52 = por %p50, %p51
      %p54 = scmp.ne.s32.totalorder %s37, %s53
      %p55 = scmp.eq.s32.totalorder %s17, 0
      %p56 = por %p54, %p55
      %s58 = sadd.s32 %s57, 1
      %p61 = scmp.eq.s32.totalorder %s11, 7
      %p62 = scmp.ne.s32.totalorder %s57, %s59
      %p63 = scmp.eq.s32.totalorder %s11, 0
      %p64 = por %p62, %p63
      %p65 = scmp.ne.s32.totalorder %s57, %s59
      %p66 = scmp.eq.s32.totalorder %s16, 7
      %p67 = por %p65, %p66
      %p68 = scmp.ne.s32.totalorder %s59, %s60
      %p69 = scmp.eq.s32.totalorder %s16, 0
      %p70 = por %p68, %p69
      %p71 = scmp.ne.s32.totalorder %s59, %s60
      %p72 = scmp.eq.s32.totalorder %s17, 7
      %p73 = por %p71, %p72
      %p75 = scmp.ne.s32.totalorder %s60, %s74
      %p76 = scmp.eq.s32.totalorder %s17, 0
      %p77 = por %p75, %p76
      %s78 = ssub.s32 %s18, %s30
      %s79 = ssub.s32 %s19, %s26
      %s80 = sor.u32 %s78, %s79
      %p81 = scmp.eq.s32.totalorder %s80, 0
      %s83 = sadd.s32 %s82, 1
      %s84 = scalar_select %p81, %s82, %s83
      %p87 = pneg %p81
      %p88 = scmp.eq.s32.totalorder %s11, 7
      %p89 = por %p87, %p88
      %p90 = scmp.ne.s32.totalorder %s82, %s85
      %p91 = scmp.eq.s32.totalorder %s11, 0
      %p92 = por %p90, %p91
      %p93 = scmp.ne.s32.totalorder %s82, %s85
      %p94 = scmp.eq.s32.totalorder %s16, 7
      %p95 = por %p93, %p94
      %p96 = scmp.ne.s32.totalorder %s85, %s86
      %p97 = scmp.eq.s32.totalorder %s16, 0
      %p98 = por %p96, %p97
      %p99 = scmp.ne.s32.totalorder %s85, %s86
      %p100 = scmp.eq.s32.totalorder %s17, 7
      %p101 = por %p99, %p100
      %p103 = scmp.ne.s32.totalorder %s86, %s102
      %p104 = scmp.eq.s32.totalorder %s17, 0
      %p105 = por %p103, %p104
      %p106 = scmp.le.s32.totalorder 1, %s11
      %p107 = scmp.lt.s32.totalorder %s11, 9
      %p108 = pnand %p106, %p107
      %p109 = pneg %p108
      // Predicated region
      $region9: #{tpu_custom_call.1} parent=5 // pred_check
        _
      $region10: #{tpu_custom_call.1} parent=5 // pred_check_branch
        %111 = sbr.rel (%p108) target = $region12
      $region11: #{tpu_custom_call.1} parent=5 // pred_region
        %s112 = ssub.s32 %s11, 1
        // Predicated region
        $region13: #{tpu_custom_call.1} parent=11 // pred_check
          %p113 = pneg %p70
        $region14: #{tpu_custom_call.1} parent=11 // pred_check_branch
          %115 = sbr.rel (%p113) target = $region16
        $region15: #{tpu_custom_call.1} parent=11 // pred_region
          _
        $region16: #{tpu_custom_call.1} parent=11 // pred_fallthru
          _
      $region12: #{tpu_custom_call.1} parent=5 // pred_fallthru
        _
      %p116 = scmp.lt.s32.totalorder %s11, 8
      // Predicated region
      $region17: #{tpu_custom_call.1} parent=5 // pred_check
        %p117 = pneg %p116
      $region18: #{tpu_custom_call.1} parent=5 // pred_check_branch
        %119 = sbr.rel (%p117) target = $region20
      $region19: #{tpu_custom_call.1} parent=5 // pred_region
        // Predicated region
        $region21: #{tpu_custom_call.1} parent=19 // pred_check
          %p120 = pneg %p43
        $region22: #{tpu_custom_call.1} parent=19 // pred_check_branch
          %122 = sbr.rel (%p120) target = $region24
        $region23: #{tpu_custom_call.1} parent=19 // pred_region
          %p123 = scmp.lt.s32.totalorder %s18, 3
          %s124 = scalar_select %p123, %s18, 3
          %s125 = smul.addr %s124, 54
          %s126 = smul.addr %s125, 8
          %s127 = scalar_lea.vmem %s0, %s126
        $region24: #{tpu_custom_call.1} parent=19 // pred_fallthru
          _
      $region20: #{tpu_custom_call.1} parent=5 // pred_fallthru
        _
      %p128 = scmp.le.s32.totalorder 1, %s11
      %p129 = scmp.lt.s32.totalorder %s11, 9
      %p130 = pnand %p128, %p129
      %p131 = pneg %p130
      // Predicated region
      $region25: #{tpu_custom_call.1} parent=5 // pred_check
        _
      $region26: #{tpu_custom_call.1} parent=5 // pred_check_branch
        %133 = sbr.rel (%p130) target = $region28
      $region27: #{tpu_custom_call.1} parent=5 // pred_region
        %s134 = ssub.s32 %s11, 1
        %p135 = scmp.lt.s32.totalorder %s20, 3
        %s136 = scalar_select %p135, %s20, 3
        %s137 = smul.addr %s136, 54
        %s138 = smul.addr %s137, 8
        %s139 = scalar_lea.vmem %s0, %s138
        %p140 = pneg %p49
        %p141 = pneg %p46
        %p142 = pneg %p70
        %p143 = pneg %p67
        %p144 = pneg %p98
        %p145 = pneg %p95
        %s146 = sand.u32 %s85, 1
        %s147 = scalar_lea.sflag [#allocation3], %s146
        %s148 = sand.u32 %s85, 1
        %s149 = smul.addr %s148, 128
        %s150 = scalar_lea.vmem [#allocation2], %s149
        %p151 = scmp.lt.s32.totalorder %s20, 3
        %s152 = scalar_select %p151, %s20, 3
        %s153 = smul.addr %s152, 54
        %s154 = smul.addr %s153, 8
        %s155 = scalar_lea.vmem %s0, %s154
        %s156 = smul.u32 8, %s21
        %s157 = smul.u32 %s21, 8
        %s158 = smul.u32 %s157, 24
        %s159 = scalar_lea.vmem %s155, %s158
        %v160 = vld [vmem:[%s159] sm:$0xff]
        %v161 = vld [vmem:[%s159 + $0x8] sm:$0xff]
        %v162 = vld [vmem:[%s159 + $0x10] sm:$0x3]
        %v163 = vld [vmem:[%s159 + $0x18] sm:$0xff]
        %v164 = vld [vmem:[%s159 + $0x20] sm:$0xff]
        %v165 = vld [vmem:[%s159 + $0x28] sm:$0x3]
        %v166 = vld [vmem:[%s159 + $0x30] sm:$0xff]
        %v167 = vld [vmem:[%s159 + $0x38] sm:$0xff]
        %v168 = vld [vmem:[%s159 + $0x40] sm:$0x3]
        %v169 = vld [vmem:[%s159 + $0x48] sm:$0xff]
        %v170 = vld [vmem:[%s159 + $0x50] sm:$0xff]
        %v171 = vld [vmem:[%s159 + $0x58] sm:$0x3]
        %v172 = vld [vmem:[%s159 + $0x60] sm:$0xff]
        %v173 = vld [vmem:[%s159 + $0x68] sm:$0xff]
        %v174 = vld [vmem:[%s159 + $0x70] sm:$0x3]
        %v175 = vld [vmem:[%s159 + $0x78] sm:$0xff]
        %v176 = vld [vmem:[%s159 + $0x80] sm:$0xff]
        %v177 = vld [vmem:[%s159 + $0x88] sm:$0x3]
        %v178 = vld [vmem:[%s159 + $0x90] sm:$0xff]
        %v179 = vld [vmem:[%s159 + $0x98] sm:$0xff]
        %v180 = vld [vmem:[%s159 + $0xa0] sm:$0x3]
        %v181 = vld [vmem:[%s159 + $0xa8] sm:$0xff]
        %v182 = vld [vmem:[%s159 + $0xb0] sm:$0xff]
        %v183 = vld [vmem:[%s159 + $0xb8] sm:$0x3]
        %s184 = sadd.s32 %s157, 1
        %s185 = smul.u32 %s184, 24
        %s186 = scalar_lea.vmem %s155, %s185
        %v187 = vld [vmem:[%s186] sm:$0xff]
        %v188 = vld [vmem:[%s186 + $0x8] sm:$0xff]
        %v189 = vld [vmem:[%s186 + $0x10] sm:$0x3]
        %v190 = vld [vmem:[%s186 + $0x18] sm:$0xff]
        %v191 = vld [vmem:[%s186 + $0x20] sm:$0xff]
        %v192 = vld [vmem:[%s186 + $0x28] sm:$0x3]
        %v193 = vld [vmem:[%s186 + $0x30] sm:$0xff]
        %v194 = vld [vmem:[%s186 + $0x38] sm:$0xff]
        %v195 = vld [vmem:[%s186 + $0x40] sm:$0x3]
        %v196 = vld [vmem:[%s186 + $0x48] sm:$0xff]
        %v197 = vld [vmem:[%s186 + $0x50] sm:$0xff]
        %v198 = vld [vmem:[%s186 + $0x58] sm:$0x3]
        %v199 = vld [vmem:[%s186 + $0x60] sm:$0xff]
        %v200 = vld [vmem:[%s186 + $0x68] sm:$0xff]
        %v201 = vld [vmem:[%s186 + $0x70] sm:$0x3]
        %v202 = vld [vmem:[%s186 + $0x78] sm:$0xff]
        %v203 = vld [vmem:[%s186 + $0x80] sm:$0xff]
        %v204 = vld [vmem:[%s186 + $0x88] sm:$0x3]
        %v205 = vld [vmem:[%s186 + $0x90] sm:$0xff]
        %v206 = vld [vmem:[%s186 + $0x98] sm:$0xff]
        %v207 = vld [vmem:[%s186 + $0xa0] sm:$0x3]
        %v208 = vld [vmem:[%s186 + $0xa8] sm:$0xff]
        %v209 = vld [vmem:[%s186 + $0xb0] sm:$0xff]
        %v210 = vld [vmem:[%s186 + $0xb8] sm:$0x3]
        %s211 = sadd.s32 %s157, 2
        %s212 = smul.u32 %s211, 24
        %s213 = scalar_lea.vmem %s155, %s212
        %v214 = vld [vmem:[%s213] sm:$0xff]
        %v215 = vld [vmem:[%s213 + $0x8] sm:$0xff]
        %v216 = vld [vmem:[%s213 + $0x10] sm:$0x3]
        %v217 = vld [vmem:[%s213 + $0x18] sm:$0xff]
        %v218 = vld [vmem:[%s213 + $0x20] sm:$0xff]
        %v219 = vld [vmem:[%s213 + $0x28] sm:$0x3]
        %v220 = vld [vmem:[%s213 + $0x30] sm:$0xff]
        %v221 = vld [vmem:[%s213 + $0x38] sm:$0xff]
        %v222 = vld [vmem:[%s213 + $0x40] sm:$0x3]
        %v223 = vld [vmem:[%s213 + $0x48] sm:$0xff]
        %v224 = vld [vmem:[%s213 + $0x50] sm:$0xff]
        %v225 = vld [vmem:[%s213 + $0x58] sm:$0x3]
        %v226 = vld [vmem:[%s213 + $0x60] sm:$0xff]
        %v227 = vld [vmem:[%s213 + $0x68] sm:$0xff]
        %v228 = vld [vmem:[%s213 + $0x70] sm:$0x3]
        %v229 = vld [vmem:[%s213 + $0x78] sm:$0xff]
        %v230 = vld [vmem:[%s213 + $0x80] sm:$0xff]
        %v231 = vld [vmem:[%s213 + $0x88] sm:$0x3]
        %v232 = vld [vmem:[%s213 + $0x90] sm:$0xff]
        %v233 = vld [vmem:[%s213 + $0x98] sm:$0xff]
        %v234 = vld [vmem:[%s213 + $0xa0] sm:$0x3]
        %v235 = vld [vmem:[%s213 + $0xa8] sm:$0xff]
        %v236 = vld [vmem:[%s213 + $0xb0] sm:$0xff]
        %v237 = vld [vmem:[%s213 + $0xb8] sm:$0x3]
        %vm262 = vcmask 1046528
        %v263 = vrot.slane %v160, 1
        %v264 = vrot.slane %v161, 1
        %v265 = vsel %vm262, %v263, %v264
        %v266 = vrot.slane %v162, 1
        %v267 = vsel %vm262, %v264, %v266
        %v268 = vrot.slane %v163, 1
        %v269 = vrot.slane %v164, 1
        %v270 = vsel %vm262, %v268, %v269
        %v271 = vrot.slane %v165, 1
        %v272 = vsel %vm262, %v269, %v271
        %v273 = vrot.slane %v166, 1
        %v274 = vrot.slane %v167, 1
        %v275 = vsel %vm262, %v273, %v274
        %v276 = vrot.slane %v168, 1
        %v277 = vsel %vm262, %v274, %v276
        %v278 = vrot.slane %v169, 1
        %v279 = vrot.slane %v170, 1
        %v280 = vsel %vm262, %v278, %v279
        %v281 = vrot.slane %v171, 1
        %v282 = vsel %vm262, %v279, %v281
        %v283 = vrot.slane %v172, 1
        %v284 = vrot.slane %v173, 1
        %v285 = vsel %vm262, %v283, %v284
        %v286 = vrot.slane %v174, 1
        %v287 = vsel %vm262, %v284, %v286
        %v288 = vrot.slane %v175, 1
        %v289 = vrot.slane %v176, 1
        %v290 = vsel %vm262, %v288, %v289
        %v291 = vrot.slane %v177, 1
        %v292 = vsel %vm262, %v289, %v291
        %v293 = vrot.slane %v178, 1
        %v294 = vrot.slane %v179, 1
        %v295 = vsel %vm262, %v293, %v294
        %v296 = vrot.slane %v180, 1
        %v297 = vsel %vm262, %v294, %v296
        %v298 = vrot.slane %v181, 1
        %v299 = vrot.slane %v182, 1
        %v300 = vsel %vm262, %v298, %v299
        %v301 = vrot.slane %v183, 1
        %v302 = vsel %vm262, %v299, %v301
        %303 = vrot.lane.b32.xlu0 %v265, 16
        %v304 = vpop.permute.xlu0 %303
        %305 = vrot.lane.b32.xlu0 %v267, 16
        %v306 = vpop.permute.xlu0 %305
        %307 = vrot.lane.b32.xlu0 %v270, 16
        %v308 = vpop.permute.xlu0 %307
        %309 = vrot.lane.b32.xlu0 %v272, 16
        %v310 = vpop.permute.xlu0 %309
        %311 = vrot.lane.b32.xlu0 %v275, 16
        %v312 = vpop.permute.xlu0 %311
        %313 = vrot.lane.b32.xlu0 %v277, 16
        %v314 = vpop.permute.xlu0 %313
        %315 = vrot.lane.b32.xlu0 %v280, 16
        %v316 = vpop.permute.xlu0 %315
        %317 = vrot.lane.b32.xlu0 %v282, 16
        %v318 = vpop.permute.xlu0 %317
        %319 = vrot.lane.b32.xlu0 %v285, 16
        %v320 = vpop.permute.xlu0 %319
        %321 = vrot.lane.b32.xlu0 %v287, 16
        %v322 = vpop.permute.xlu0 %321
        %323 = vrot.lane.b32.xlu0 %v290, 16
        %v324 = vpop.permute.xlu0 %323
        %325 = vrot.lane.b32.xlu0 %v292, 16
        %v326 = vpop.permute.xlu0 %325
        %327 = vrot.lane.b32.xlu0 %v295, 16
        %v328 = vpop.permute.xlu0 %327
        %329 = vrot.lane.b32.xlu0 %v297, 16
        %v330 = vpop.permute.xlu0 %329
        %331 = vrot.lane.b32.xlu0 %v300, 16
        %v332 = vpop.permute.xlu0 %331
        %333 = vrot.lane.b32.xlu0 %v302, 16
        %v334 = vpop.permute.xlu0 %333
        %vm351 = vcmask 1045504
        %v352 = vrot.slane %v160, 2
        %v353 = vrot.slane %v161, 2
        %v354 = vsel %vm351, %v352, %v353
        %v355 = vrot.slane %v162, 2
        %v356 = vsel %vm351, %v353, %v355
        %v357 = vrot.slane %v163, 2
        %v358 = vrot.slane %v164, 2
        %v359 = vsel %vm351, %v357, %v358
        %v360 = vrot.slane %v165, 2
        %v361 = vsel %vm351, %v358, %v360
        %v362 = vrot.slane %v166, 2
        %v363 = vrot.slane %v167, 2
        %v364 = vsel %vm351, %v362, %v363
        %v365 = vrot.slane %v168, 2
        %v366 = vsel %vm351, %v363, %v365
        %v367 = vrot.slane %v169, 2
        %v368 = vrot.slane %v170, 2
        %v369 = vsel %vm351, %v367, %v368
        %v370 = vrot.slane %v171, 2
        %v371 = vsel %vm351, %v368, %v370
        %v372 = vrot.slane %v172, 2
        %v373 = vrot.slane %v173, 2
        %v374 = vsel %vm351, %v372, %v373
        %v375 = vrot.slane %v174, 2
        %v376 = vsel %vm351, %v373, %v375
        %v377 = vrot.slane %v175, 2
        %v378 = vrot.slane %v176, 2
        %v379 = vsel %vm351, %v377, %v378
        %v380 = vrot.slane %v177, 2
        %v381 = vsel %vm351, %v378, %v380
        %v382 = vrot.slane %v178, 2
        %v383 = vrot.slane %v179, 2
        %v384 = vsel %vm351, %v382, %v383
        %v385 = vrot.slane %v180, 2
        %v386 = vsel %vm351, %v383, %v385
        %v387 = vrot.slane %v181, 2
        %v388 = vrot.slane %v182, 2
        %v389 = vsel %vm351, %v387, %v388
        %v390 = vrot.slane %v183, 2
        %v391 = vsel %vm351, %v388, %v390
        %392 = vrot.lane.b32.xlu0 %v354, 32
        %v393 = vpop.permute.xlu0 %392
        %394 = vrot.lane.b32.xlu0 %v356, 32
        %v395 = vpop.permute.xlu0 %394
        %396 = vrot.lane.b32.xlu0 %v359, 32
        %v397 = vpop.permute.xlu0 %396
        %398 = vrot.lane.b32.xlu0 %v361, 32
        %v399 = vpop.permute.xlu0 %398
        %400 = vrot.lane.b32.xlu0 %v364, 32
        %v401 = vpop.permute.xlu0 %400
        %402 = vrot.lane.b32.xlu0 %v366, 32
        %v403 = vpop.permute.xlu0 %402
        %404 = vrot.lane.b32.xlu0 %v369, 32
        %v405 = vpop.permute.xlu0 %404
        %406 = vrot.lane.b32.xlu0 %v371, 32
        %v407 = vpop.permute.xlu0 %406
        %408 = vrot.lane.b32.xlu0 %v374, 32
        %v409 = vpop.permute.xlu0 %408
        %410 = vrot.lane.b32.xlu0 %v376, 32
        %v411 = vpop.permute.xlu0 %410
        %412 = vrot.lane.b32.xlu0 %v379, 32
        %v413 = vpop.permute.xlu0 %412
        %414 = vrot.lane.b32.xlu0 %v381, 32
        %v415 = vpop.permute.xlu0 %414
        %416 = vrot.lane.b32.xlu0 %v384, 32
        %v417 = vpop.permute.xlu0 %416
        %418 = vrot.lane.b32.xlu0 %v386, 32
        %v419 = vpop.permute.xlu0 %418
        %420 = vrot.lane.b32.xlu0 %v389, 32
        %v421 = vpop.permute.xlu0 %420
        %422 = vrot.lane.b32.xlu0 %v391, 32
        %v423 = vpop.permute.xlu0 %422
        %456 = vrot.lane.b32.xlu0 %v187, 48
        %v457 = vpop.permute.xlu0 %456
        %458 = vrot.lane.b32.xlu0 %v188, 48
        %v459 = vpop.permute.xlu0 %458
        %460 = vrot.lane.b32.xlu0 %v190, 48
        %v461 = vpop.permute.xlu0 %460
        %462 = vrot.lane.b32.xlu0 %v191, 48
        %v463 = vpop.permute.xlu0 %462
        %464 = vrot.lane.b32.xlu0 %v193, 48
        %v465 = vpop.permute.xlu0 %464
        %466 = vrot.lane.b32.xlu0 %v194, 48
        %v467 = vpop.permute.xlu0 %466
        %468 = vrot.lane.b32.xlu0 %v196, 48
        %v469 = vpop.permute.xlu0 %468
        %470 = vrot.lane.b32.xlu0 %v197, 48
        %v471 = vpop.permute.xlu0 %470
        %472 = vrot.lane.b32.xlu0 %v199, 48
        %v473 = vpop.permute.xlu0 %472
        %474 = vrot.lane.b32.xlu0 %v200, 48
        %v475 = vpop.permute.xlu0 %474
        %476 = vrot.lane.b32.xlu0 %v202, 48
        %v477 = vpop.permute.xlu0 %476
        %478 = vrot.lane.b32.xlu0 %v203, 48
        %v479 = vpop.permute.xlu0 %478
        %480 = vrot.lane.b32.xlu0 %v205, 48
        %v481 = vpop.permute.xlu0 %480
        %482 = vrot.lane.b32.xlu0 %v206, 48
        %v483 = vpop.permute.xlu0 %482
        %484 = vrot.lane.b32.xlu0 %v208, 48
        %v485 = vpop.permute.xlu0 %484
        %486 = vrot.lane.b32.xlu0 %v209, 48
        %v487 = vpop.permute.xlu0 %486
        %v512 = vrot.slane %v187, 1
        %v513 = vrot.slane %v188, 1
        %v514 = vsel %vm262, %v512, %v513
        %v515 = vrot.slane %v189, 1
        %v516 = vsel %vm262, %v513, %v515
        %v517 = vrot.slane %v190, 1
        %v518 = vrot.slane %v191, 1
        %v519 = vsel %vm262, %v517, %v518
        %v520 = vrot.slane %v192, 1
        %v521 = vsel %vm262, %v518, %v520
        %v522 = vrot.slane %v193, 1
        %v523 = vrot.slane %v194, 1
        %v524 = vsel %vm262, %v522, %v523
        %v525 = vrot.slane %v195, 1
        %v526 = vsel %vm262, %v523, %v525
        %v527 = vrot.slane %v196, 1
        %v528 = vrot.slane %v197, 1
        %v529 = vsel %vm262, %v527, %v528
        %v530 = vrot.slane %v198, 1
        %v531 = vsel %vm262, %v528, %v530
        %v532 = vrot.slane %v199, 1
        %v533 = vrot.slane %v200, 1
        %v534 = vsel %vm262, %v532, %v533
        %v535 = vrot.slane %v201, 1
        %v536 = vsel %vm262, %v533, %v535
        %v537 = vrot.slane %v202, 1
        %v538 = vrot.slane %v203, 1
        %v539 = vsel %vm262, %v537, %v538
        %v540 = vrot.slane %v204, 1
        %v541 = vsel %vm262, %v538, %v540
        %v542 = vrot.slane %v205, 1
        %v543 = vrot.slane %v206, 1
        %v544 = vsel %vm262, %v542, %v543
        %v545 = vrot.slane %v207, 1
        %v546 = vsel %vm262, %v543, %v545
        %v547 = vrot.slane %v208, 1
        %v548 = vrot.slane %v209, 1
        %v549 = vsel %vm262, %v547, %v548
        %v550 = vrot.slane %v210, 1
        %v551 = vsel %vm262, %v548, %v550
        %552 = vrot.lane.b32.xlu0 %v514, 64
        %v553 = vpop.permute.xlu0 %552
        %554 = vrot.lane.b32.xlu0 %v516, 64
        %v555 = vpop.permute.xlu0 %554
        %556 = vrot.lane.b32.xlu0 %v519, 64
        %v557 = vpop.permute.xlu0 %556
        %558 = vrot.lane.b32.xlu0 %v521, 64
        %v559 = vpop.permute.xlu0 %558
        %560 = vrot.lane.b32.xlu0 %v524, 64
        %v561 = vpop.permute.xlu0 %560
        %562 = vrot.lane.b32.xlu0 %v526, 64
        %v563 = vpop.permute.xlu0 %562
        %564 = vrot.lane.b32.xlu0 %v529, 64
        %v565 = vpop.permute.xlu0 %564
        %566 = vrot.lane.b32.xlu0 %v531, 64
        %v567 = vpop.permute.xlu0 %566
        %568 = vrot.lane.b32.xlu0 %v534, 64
        %v569 = vpop.permute.xlu0 %568
        %570 = vrot.lane.b32.xlu0 %v536, 64
        %v571 = vpop.permute.xlu0 %570
        %572 = vrot.lane.b32.xlu0 %v539, 64
        %v573 = vpop.permute.xlu0 %572
        %574 = vrot.lane.b32.xlu0 %v541, 64
        %v575 = vpop.permute.xlu0 %574
        %576 = vrot.lane.b32.xlu0 %v544, 64
        %v577 = vpop.permute.xlu0 %576
        %578 = vrot.lane.b32.xlu0 %v546, 64
        %v579 = vpop.permute.xlu0 %578
        %580 = vrot.lane.b32.xlu0 %v549, 64
        %v581 = vpop.permute.xlu0 %580
        %582 = vrot.lane.b32.xlu0 %v551, 64
        %v583 = vpop.permute.xlu0 %582
        %v600 = vrot.slane %v187, 2
        %v601 = vrot.slane %v188, 2
        %v602 = vsel %vm351, %v600, %v601
        %v603 = vrot.slane %v189, 2
        %v604 = vsel %vm351, %v601, %v603
        %v605 = vrot.slane %v190, 2
        %v606 = vrot.slane %v191, 2
        %v607 = vsel %vm351, %v605, %v606
        %v608 = vrot.slane %v192, 2
        %v609 = vsel %vm351, %v606, %v608
        %v610 = vrot.slane %v193, 2
        %v611 = vrot.slane %v194, 2
        %v612 = vsel %vm351, %v610, %v611
        %v613 = vrot.slane %v195, 2
        %v614 = vsel %vm351, %v611, %v613
        %v615 = vrot.slane %v196, 2
        %v616 = vrot.slane %v197, 2
        %v617 = vsel %vm351, %v615, %v616
        %v618 = vrot.slane %v198, 2
        %v619 = vsel %vm351, %v616, %v618
        %v620 = vrot.slane %v199, 2
        %v621 = vrot.slane %v200, 2
        %v622 = vsel %vm351, %v620, %v621
        %v623 = vrot.slane %v201, 2
        %v624 = vsel %vm351, %v621, %v623
        %v625 = vrot.slane %v202, 2
        %v626 = vrot.slane %v203, 2
        %v627 = vsel %vm351, %v625, %v626
        %v628 = vrot.slane %v204, 2
        %v629 = vsel %vm351, %v626, %v628
        %v630 = vrot.slane %v205, 2
        %v631 = vrot.slane %v206, 2
        %v632 = vsel %vm351, %v630, %v631
        %v633 = vrot.slane %v207, 2
        %v634 = vsel %vm351, %v631, %v633
        %v635 = vrot.slane %v208, 2
        %v636 = vrot.slane %v209, 2
        %v637 = vsel %vm351, %v635, %v636
        %v638 = vrot.slane %v210, 2
        %v639 = vsel %vm351, %v636, %v638
        %640 = vrot.lane.b32.xlu0 %v602, 80
        %v641 = vpop.permute.xlu0 %640
        %642 = vrot.lane.b32.xlu0 %v604, 80
        %v643 = vpop.permute.xlu0 %642
        %644 = vrot.lane.b32.xlu0 %v607, 80
        %v645 = vpop.permute.xlu0 %644
        %646 = vrot.lane.b32.xlu0 %v609, 80
        %v647 = vpop.permute.xlu0 %646
        %648 = vrot.lane.b32.xlu0 %v612, 80
        %v649 = vpop.permute.xlu0 %648
        %650 = vrot.lane.b32.xlu0 %v614, 80
        %v651 = vpop.permute.xlu0 %650
        %652 = vrot.lane.b32.xlu0 %v617, 80
        %v653 = vpop.permute.xlu0 %652
        %654 = vrot.lane.b32.xlu0 %v619, 80
        %v655 = vpop.permute.xlu0 %654
        %656 = vrot.lane.b32.xlu0 %v622, 80
        %v657 = vpop.permute.xlu0 %656
        %658 = vrot.lane.b32.xlu0 %v624, 80
        %v659 = vpop.permute.xlu0 %658
        %660 = vrot.lane.b32.xlu0 %v627, 80
        %v661 = vpop.permute.xlu0 %660
        %662 = vrot.lane.b32.xlu0 %v629, 80
        %v663 = vpop.permute.xlu0 %662
        %664 = vrot.lane.b32.xlu0 %v632, 80
        %v665 = vpop.permute.xlu0 %664
        %666 = vrot.lane.b32.xlu0 %v634, 80
        %v667 = vpop.permute.xlu0 %666
        %668 = vrot.lane.b32.xlu0 %v637, 80
        %v669 = vpop.permute.xlu0 %668
        %670 = vrot.lane.b32.xlu0 %v639, 80
        %v671 = vpop.permute.xlu0 %670
        %704 = vrot.lane.b32.xlu0 %v214, 96
        %v705 = vpop.permute.xlu0 %704
        %706 = vrot.lane.b32.xlu0 %v215, 96
        %v707 = vpop.permute.xlu0 %706
        %708 = vrot.lane.b32.xlu0 %v217, 96
        %v709 = vpop.permute.xlu0 %708
        %710 = vrot.lane.b32.xlu0 %v218, 96
        %v711 = vpop.permute.xlu0 %710
        %712 = vrot.lane.b32.xlu0 %v220, 96
        %v713 = vpop.permute.xlu0 %712
        %714 = vrot.lane.b32.xlu0 %v221, 96
        %v715 = vpop.permute.xlu0 %714
        %716 = vrot.lane.b32.xlu0 %v223, 96
        %v717 = vpop.permute.xlu0 %716
        %718 = vrot.lane.b32.xlu0 %v224, 96
        %v719 = vpop.permute.xlu0 %718
        %720 = vrot.lane.b32.xlu0 %v226, 96
        %v721 = vpop.permute.xlu0 %720
        %722 = vrot.lane.b32.xlu0 %v227, 96
        %v723 = vpop.permute.xlu0 %722
        %724 = vrot.lane.b32.xlu0 %v229, 96
        %v725 = vpop.permute.xlu0 %724
        %726 = vrot.lane.b32.xlu0 %v230, 96
        %v727 = vpop.permute.xlu0 %726
        %728 = vrot.lane.b32.xlu0 %v232, 96
        %v729 = vpop.permute.xlu0 %728
        %730 = vrot.lane.b32.xlu0 %v233, 96
        %v731 = vpop.permute.xlu0 %730
        %732 = vrot.lane.b32.xlu0 %v235, 96
        %v733 = vpop.permute.xlu0 %732
        %734 = vrot.lane.b32.xlu0 %v236, 96
        %v735 = vpop.permute.xlu0 %734
        %v760 = vrot.slane %v214, 1
        %v761 = vrot.slane %v215, 1
        %v762 = vsel %vm262, %v760, %v761
        %v763 = vrot.slane %v216, 1
        %v764 = vsel %vm262, %v761, %v763
        %v765 = vrot.slane %v217, 1
        %v766 = vrot.slane %v218, 1
        %v767 = vsel %vm262, %v765, %v766
        %v768 = vrot.slane %v219, 1
        %v769 = vsel %vm262, %v766, %v768
        %v770 = vrot.slane %v220, 1
        %v771 = vrot.slane %v221, 1
        %v772 = vsel %vm262, %v770, %v771
        %v773 = vrot.slane %v222, 1
        %v774 = vsel %vm262, %v771, %v773
        %v775 = vrot.slane %v223, 1
        %v776 = vrot.slane %v224, 1
        %v777 = vsel %vm262, %v775, %v776
        %v778 = vrot.slane %v225, 1
        %v779 = vsel %vm262, %v776, %v778
        %v780 = vrot.slane %v226, 1
        %v781 = vrot.slane %v227, 1
        %v782 = vsel %vm262, %v780, %v781
        %v783 = vrot.slane %v228, 1
        %v784 = vsel %vm262, %v781, %v783
        %v785 = vrot.slane %v229, 1
        %v786 = vrot.slane %v230, 1
        %v787 = vsel %vm262, %v785, %v786
        %v788 = vrot.slane %v231, 1
        %v789 = vsel %vm262, %v786, %v788
        %v790 = vrot.slane %v232, 1
        %v791 = vrot.slane %v233, 1
        %v792 = vsel %vm262, %v790, %v791
        %v793 = vrot.slane %v234, 1
        %v794 = vsel %vm262, %v791, %v793
        %v795 = vrot.slane %v235, 1
        %v796 = vrot.slane %v236, 1
        %v797 = vsel %vm262, %v795, %v796
        %v798 = vrot.slane %v237, 1
        %v799 = vsel %vm262, %v796, %v798
        %800 = vrot.lane.b32.xlu0 %v762, 112
        %v801 = vpop.permute.xlu0 %800
        %802 = vrot.lane.b32.xlu0 %v764, 112
        %v803 = vpop.permute.xlu0 %802
        %804 = vrot.lane.b32.xlu0 %v767, 112
        %v805 = vpop.permute.xlu0 %804
        %806 = vrot.lane.b32.xlu0 %v769, 112
        %v807 = vpop.permute.xlu0 %806
        %808 = vrot.lane.b32.xlu0 %v772, 112
        %v809 = vpop.permute.xlu0 %808
        %810 = vrot.lane.b32.xlu0 %v774, 112
        %v811 = vpop.permute.xlu0 %810
        %812 = vrot.lane.b32.xlu0 %v777, 112
        %v813 = vpop.permute.xlu0 %812
        %814 = vrot.lane.b32.xlu0 %v779, 112
        %v815 = vpop.permute.xlu0 %814
        %816 = vrot.lane.b32.xlu0 %v782, 112
        %v817 = vpop.permute.xlu0 %816
        %818 = vrot.lane.b32.xlu0 %v784, 112
        %v819 = vpop.permute.xlu0 %818
        %820 = vrot.lane.b32.xlu0 %v787, 112
        %v821 = vpop.permute.xlu0 %820
        %822 = vrot.lane.b32.xlu0 %v789, 112
        %v823 = vpop.permute.xlu0 %822
        %824 = vrot.lane.b32.xlu0 %v792, 112
        %v825 = vpop.permute.xlu0 %824
        %826 = vrot.lane.b32.xlu0 %v794, 112
        %v827 = vpop.permute.xlu0 %826
        %828 = vrot.lane.b32.xlu0 %v797, 112
        %v829 = vpop.permute.xlu0 %828
        %830 = vrot.lane.b32.xlu0 %v799, 112
        %v831 = vpop.permute.xlu0 %830
        %v848 = vrot.slane %v214, 2
        %v849 = vrot.slane %v215, 2
        %v850 = vsel %vm351, %v848, %v849
        %v851 = vrot.slane %v216, 2
        %v852 = vsel %vm351, %v849, %v851
        %v853 = vrot.slane %v217, 2
        %v854 = vrot.slane %v218, 2
        %v855 = vsel %vm351, %v853, %v854
        %v856 = vrot.slane %v219, 2
        %v857 = vsel %vm351, %v854, %v856
        %v858 = vrot.slane %v220, 2
        %v859 = vrot.slane %v221, 2
        %v860 = vsel %vm351, %v858, %v859
        %v861 = vrot.slane %v222, 2
        %v862 = vsel %vm351, %v859, %v861
        %v863 = vrot.slane %v223, 2
        %v864 = vrot.slane %v224, 2
        %v865 = vsel %vm351, %v863, %v864
        %v866 = vrot.slane %v225, 2
        %v867 = vsel %vm351, %v864, %v866
        %v868 = vrot.slane %v226, 2
        %v869 = vrot.slane %v227, 2
        %v870 = vsel %vm351, %v868, %v869
        %v871 = vrot.slane %v228, 2
        %v872 = vsel %vm351, %v869, %v871
        %v873 = vrot.slane %v229, 2
        %v874 = vrot.slane %v230, 2
        %v875 = vsel %vm351, %v873, %v874
        %v876 = vrot.slane %v231, 2
        %v877 = vsel %vm351, %v874, %v876
        %v878 = vrot.slane %v232, 2
        %v879 = vrot.slane %v233, 2
        %v880 = vsel %vm351, %v878, %v879
        %v881 = vrot.slane %v234, 2
        %v882 = vsel %vm351, %v879, %v881
        %v883 = vrot.slane %v235, 2
        %v884 = vrot.slane %v236, 2
        %v885 = vsel %vm351, %v883, %v884
        %v886 = vrot.slane %v237, 2
        %v887 = vsel %vm351, %v884, %v886
        %vm888 = vcmask 130048
        %v889 = vsel %vm888, %v160, %v304
        %v890 = vsel %vm888, %v161, %v306
        %v891 = vsel %vm888, %v163, %v308
        %v892 = vsel %vm888, %v164, %v310
        %v893 = vsel %vm888, %v166, %v312
        %v894 = vsel %vm888, %v167, %v314
        %v895 = vsel %vm888, %v169, %v316
        %v896 = vsel %vm888, %v170, %v318
        %v897 = vsel %vm888, %v172, %v320
        %v898 = vsel %vm888, %v173, %v322
        %v899 = vsel %vm888, %v175, %v324
        %v900 = vsel %vm888, %v176, %v326
        %v901 = vsel %vm888, %v178, %v328
        %v902 = vsel %vm888, %v179, %v330
        %v903 = vsel %vm888, %v181, %v332
        %v904 = vsel %vm888, %v182, %v334
        %vm905 = vcmask 261120
        %v906 = vsel %vm905, %v889, %v393
        %v907 = vsel %vm905, %v890, %v395
        %v908 = vsel %vm905, %v891, %v397
        %v909 = vsel %vm905, %v892, %v399
        %v910 = vsel %vm905, %v893, %v401
        %v911 = vsel %vm905, %v894, %v403
        %v912 = vsel %vm905, %v895, %v405
        %v913 = vsel %vm905, %v896, %v407
        %v914 = vsel %vm905, %v897, %v409
        %v915 = vsel %vm905, %v898, %v411
        %v916 = vsel %vm905, %v899, %v413
        %v917 = vsel %vm905, %v900, %v415
        %v918 = vsel %vm905, %v901, %v417
        %v919 = vsel %vm905, %v902, %v419
        %v920 = vsel %vm905, %v903, %v421
        %v921 = vsel %vm905, %v904, %v423
        %vm922 = vcmask 392192
        %v923 = vsel %vm922, %v906, %v457
        %v924 = vsel %vm922, %v907, %v459
        %v925 = vsel %vm922, %v908, %v461
        %v926 = vsel %vm922, %v909, %v463
        %v927 = vsel %vm922, %v910, %v465
        %v928 = vsel %vm922, %v911, %v467
        %v929 = vsel %vm922, %v912, %v469
        %v930 = vsel %vm922, %v913, %v471
        %v931 = vsel %vm922, %v914, %v473
        %v932 = vsel %vm922, %v915, %v475
        %v933 = vsel %vm922, %v916, %v477
        %v934 = vsel %vm922, %v917, %v479
        %v935 = vsel %vm922, %v918, %v481
        %v936 = vsel %vm922, %v919, %v483
        %v937 = vsel %vm922, %v920, %v485
        %v938 = vsel %vm922, %v921, %v487
        %vm939 = vcmask 523264
        %v940 = vsel %vm939, %v923, %v553
        %v941 = vsel %vm939, %v924, %v555
        %v942 = vsel %vm939, %v925, %v557
        %v943 = vsel %vm939, %v926, %v559
        %v944 = vsel %vm939, %v927, %v561
        %v945 = vsel %vm939, %v928, %v563
        %v946 = vsel %vm939, %v929, %v565
        %v947 = vsel %vm939, %v930, %v567
        %v948 = vsel %vm939, %v931, %v569
        %v949 = vsel %vm939, %v932, %v571
        %v950 = vsel %vm939, %v933, %v573
        %v951 = vsel %vm939, %v934, %v575
        %v952 = vsel %vm939, %v935, %v577
        %v953 = vsel %vm939, %v936, %v579
        %v954 = vsel %vm939, %v937, %v581
        %v955 = vsel %vm939, %v938, %v583
        %vm956 = vcmask 654336
        %v957 = vsel %vm956, %v940, %v641
        %v958 = vsel %vm956, %v941, %v643
        %v959 = vsel %vm956, %v942, %v645
        %v960 = vsel %vm956, %v943, %v647
        %v961 = vsel %vm956, %v944, %v649
        %v962 = vsel %vm956, %v945, %v651
        %v963 = vsel %vm956, %v946, %v653
        %v964 = vsel %vm956, %v947, %v655
        %v965 = vsel %vm956, %v948, %v657
        %v966 = vsel %vm956, %v949, %v659
        %v967 = vsel %vm956, %v950, %v661
        %v968 = vsel %vm956, %v951, %v663
        %v969 = vsel %vm956, %v952, %v665
        %v970 = vsel %vm956, %v953, %v667
        %v971 = vsel %vm956, %v954, %v669
        %v972 = vsel %vm956, %v955, %v671
        %vm973 = vcmask 785408
        %v974 = vsel %vm973, %v957, %v705
        %v975 = vsel %vm973, %v958, %v707
        %v976 = vsel %vm973, %v959, %v709
        %v977 = vsel %vm973, %v960, %v711
        %v978 = vsel %vm973, %v961, %v713
        %v979 = vsel %vm973, %v962, %v715
        %v980 = vsel %vm973, %v963, %v717
        %v981 = vsel %vm973, %v964, %v719
        %v982 = vsel %vm973, %v965, %v721
        %v983 = vsel %vm973, %v966, %v723
        %v984 = vsel %vm973, %v967, %v725
        %v985 = vsel %vm973, %v968, %v727
        %v986 = vsel %vm973, %v969, %v729
        %v987 = vsel %vm973, %v970, %v731
        %v988 = vsel %vm973, %v971, %v733
        %v989 = vsel %vm973, %v972, %v735
        %vm990 = vcmask 916480
        %v991 = vsel %vm990, %v974, %v801
        %v992 = vsel %vm990, %v975, %v803
        %v993 = vsel %vm990, %v976, %v805
        %v994 = vsel %vm990, %v977, %v807
        %v995 = vsel %vm990, %v978, %v809
        %v996 = vsel %vm990, %v979, %v811
        %v997 = vsel %vm990, %v980, %v813
        %v998 = vsel %vm990, %v981, %v815
        %v999 = vsel %vm990, %v982, %v817
        %v1000 = vsel %vm990, %v983, %v819
        %v1001 = vsel %vm990, %v984, %v821
        %v1002 = vsel %vm990, %v985, %v823
        %v1003 = vsel %vm990, %v986, %v825
        %v1004 = vsel %vm990, %v987, %v827
        %v1005 = vsel %vm990, %v988, %v829
        %v1006 = vsel %vm990, %v989, %v831
        %v1007 = vld [vmem:[%s1] sm:$0xff]
        %v1008 = vld [vmem:[%s1 + $0x8] sm:$0xff]
        %v1009 = vld [vmem:[%s1 + $0x10] sm:$0xff]
        %v1010 = vld [vmem:[%s1 + $0x18] sm:$0xff]
        %v1011 = vld [vmem:[%s1 + $0x20] sm:$0xff]
        %v1012 = vld [vmem:[%s1 + $0x28] sm:$0xff]
        %v1013 = vld [vmem:[%s1 + $0x30] sm:$0xff]
        %v1014 = vld [vmem:[%s1 + $0x38] sm:$0xff]
        %v1015 = vld [vmem:[%s1 + $0x40] sm:$0xff]
        %v1016 = vld [vmem:[%s1 + $0x48] sm:$0xff]
        %v1017 = vld [vmem:[%s1 + $0x50] sm:$0xff]
        %v1018 = vld [vmem:[%s1 + $0x58] sm:$0xff]
        %v1019 = vld [vmem:[%s1 + $0x60] sm:$0xff]
        %v1020 = vld [vmem:[%s1 + $0x68] sm:$0xff]
        %v1021 = vld [vmem:[%s1 + $0x70] sm:$0xff]
        %v1022 = vld [vmem:[%s1 + $0x78] sm:$0xff]
        %v1023 = vld [vmem:[%s1 + $0x80] sm:$0xff]
        %v1024 = vld [vmem:[%s1 + $0x88] sm:$0xff]
        %v1025 = vsel %vm888, %v850, 0
        %v1027 = vsel %vm888, %v852, 0
        %v1029 = vsel %vm888, %v855, 0
        %v1031 = vsel %vm888, %v857, 0
        %v1033 = vsel %vm888, %v860, 0
        %v1035 = vsel %vm888, %v862, 0
        %v1037 = vsel %vm888, %v865, 0
        %v1039 = vsel %vm888, %v867, 0
        %v1041 = vsel %vm888, %v870, 0
        %v1043 = vsel %vm888, %v872, 0
        %v1045 = vsel %vm888, %v875, 0
        %v1047 = vsel %vm888, %v877, 0
        %v1049 = vsel %vm888, %v880, 0
        %v1051 = vsel %vm888, %v882, 0
        %v1053 = vsel %vm888, %v885, 0
        %v1055 = vsel %vm888, %v887, 0
        %1057 = vmatpush.msra.mxu0 %v1022
        %1058 = vmatpush.msra.mxu0 %v1021
        %1059 = vmatpush.msra.mxu0 %v1020
        %1060 = vmatpush.msra.mxu0 %v1019
        %1061 = vmatpush.msra.mxu0 %v1018
        %1062 = vmatpush.msra.mxu0 %v1017
        %1063 = vmatpush.msra.mxu0 %v1016
        %1064 = vmatpush.msra.mxu0 %v1015
        %1065 = vmatpush.msra.mxu0 %v1014
        %1066 = vmatpush.msra.mxu0 %v1013
        %1067 = vmatpush.msra.mxu0 %v1012
        %1068 = vmatpush.msra.mxu0 %v1011
        %1069 = vmatpush.msra.mxu0 %v1010
        %1070 = vmatpush.msra.mxu0 %v1009
        %1071 = vmatpush.msra.mxu0 %v1008
        %1072 = vmatpush.msra.mxu0 %v1007
        %1073 = vmatmul.f32.gmra.mxu0 %v991
        %v1074 = vpop.f32.mrf.mxu0
        %v1075 = vadd.f32 0.0, %v1074
        %1076 = vmatmul.f32.gmra.mxu0 %v992
        %v1077 = vpop.f32.mrf.mxu0
        %v1078 = vadd.f32 0.0, %v1077
        %1079 = vmatmul.f32.gmra.mxu0 %v993
        %v1080 = vpop.f32.mrf.mxu0
        %v1081 = vadd.f32 0.0, %v1080
        %1082 = vmatmul.f32.gmra.mxu0 %v994
        %v1083 = vpop.f32.mrf.mxu0
        %v1084 = vadd.f32 0.0, %v1083
        %1085 = vmatmul.f32.gmra.mxu0 %v995
        %v1086 = vpop.f32.mrf.mxu0
        %v1087 = vadd.f32 0.0, %v1086
        %1088 = vmatmul.f32.gmra.mxu0 %v996
        %v1089 = vpop.f32.mrf.mxu0
        %v1090 = vadd.f32 0.0, %v1089
        %1091 = vmatmul.f32.gmra.mxu0 %v997
        %v1092 = vpop.f32.mrf.mxu0
        %v1093 = vadd.f32 0.0, %v1092
        %1094 = vmatmul.f32.gmra.mxu0 %v998
        %v1095 = vpop.f32.mrf.mxu0
        %v1096 = vadd.f32 0.0, %v1095
        %1097 = vmatmul.f32.gmra.mxu0 %v999
        %v1098 = vpop.f32.mrf.mxu0
        %v1099 = vadd.f32 0.0, %v1098
        %1100 = vmatmul.f32.gmra.mxu0 %v1000
        %v1101 = vpop.f32.mrf.mxu0
        %v1102 = vadd.f32 0.0, %v1101
        %1103 = vmatmul.f32.gmra.mxu0 %v1001
        %v1104 = vpop.f32.mrf.mxu0
        %v1105 = vadd.f32 0.0, %v1104
        %1106 = vmatmul.f32.gmra.mxu0 %v1002
        %v1107 = vpop.f32.mrf.mxu0
        %v1108 = vadd.f32 0.0, %v1107
        %1109 = vmatmul.f32.gmra.mxu0 %v1003
        %v1110 = vpop.f32.mrf.mxu0
        %v1111 = vadd.f32 0.0, %v1110
        %1112 = vmatmul.f32.gmra.mxu0 %v1004
        %v1113 = vpop.f32.mrf.mxu0
        %v1114 = vadd.f32 0.0, %v1113
        %1115 = vmatmul.f32.gmra.mxu0 %v1005
        %v1116 = vpop.f32.mrf.mxu0
        %v1117 = vadd.f32 0.0, %v1116
        %1118 = vmatmul.f32.gmra.mxu0 %v1006
        %v1119 = vpop.f32.mrf.mxu0
        %v1120 = vadd.f32 0.0, %v1119
        %1121 = vdwg.mxu0
        %1122 = vmatpush.msra.mxu0 0.0
        %1123 = vmatpush.msra.mxu0 0.0
        %1124 = vmatpush.msra.mxu0 0.0
        %1125 = vmatpush.msra.mxu0 0.0
        %1126 = vmatpush.msra.mxu0 0.0
        %1127 = vmatpush.msra.mxu0 0.0
        %1128 = vmatpush.msra.mxu0 0.0
        %1129 = vmatpush.msra.mxu0 0.0
        %1130 = vmatpush.msra.mxu0 0.0
        %1131 = vmatpush.msra.mxu0 0.0
        %1132 = vmatpush.msra.mxu0 0.0
        %1133 = vmatpush.msra.mxu0 0.0
        %1134 = vmatpush.msra.mxu0 0.0
        %1135 = vmatpush.msra.mxu0 0.0
        %1136 = vmatpush.msra.mxu0 %v1024
        %1137 = vmatpush.msra.mxu0 %v1023
        %1138 = vmatmul.f32.gmra.mxu0 %v1025
        %v1139 = vpop.f32.mrf.mxu0
        %v1140 = vadd.f32 %v1075, %v1139
        %1141 = vmatmul.f32.gmra.mxu0 %v1027
        %v1142 = vpop.f32.mrf.mxu0
        %v1143 = vadd.f32 %v1078, %v1142
        %1144 = vmatmul.f32.gmra.mxu0 %v1029
        %v1145 = vpop.f32.mrf.mxu0
        %v1146 = vadd.f32 %v1081, %v1145
        %1147 = vmatmul.f32.gmra.mxu0 %v1031
        %v1148 = vpop.f32.mrf.mxu0
        %v1149 = vadd.f32 %v1084, %v1148
        %1150 = vmatmul.f32.gmra.mxu0 %v1033
        %v1151 = vpop.f32.mrf.mxu0
        %v1152 = vadd.f32 %v1087, %v1151
        %1153 = vmatmul.f32.gmra.mxu0 %v1035
        %v1154 = vpop.f32.mrf.mxu0
        %v1155 = vadd.f32 %v1090, %v1154
        %1156 = vmatmul.f32.gmra.mxu0 %v1037
        %v1157 = vpop.f32.mrf.mxu0
        %v1158 = vadd.f32 %v1093, %v1157
        %1159 = vmatmul.f32.gmra.mxu0 %v1039
        %v1160 = vpop.f32.mrf.mxu0
        %v1161 = vadd.f32 %v1096, %v1160
        %1162 = vmatmul.f32.gmra.mxu0 %v1041
        %v1163 = vpop.f32.mrf.mxu0
        %v1164 = vadd.f32 %v1099, %v1163
        %1165 = vmatmul.f32.gmra.mxu0 %v1043
        %v1166 = vpop.f32.mrf.mxu0
        %v1167 = vadd.f32 %v1102, %v1166
        %1168 = vmatmul.f32.gmra.mxu0 %v1045
        %v1169 = vpop.f32.mrf.mxu0
        %v1170 = vadd.f32 %v1105, %v1169
        %1171 = vmatmul.f32.gmra.mxu0 %v1047
        %v1172 = vpop.f32.mrf.mxu0
        %v1173 = vadd.f32 %v1108, %v1172
        %1174 = vmatmul.f32.gmra.mxu0 %v1049
        %v1175 = vpop.f32.mrf.mxu0
        %v1176 = vadd.f32 %v1111, %v1175
        %1177 = vmatmul.f32.gmra.mxu0 %v1051
        %v1178 = vpop.f32.mrf.mxu0
        %v1179 = vadd.f32 %v1114, %v1178
        %1180 = vmatmul.f32.gmra.mxu0 %v1053
        %v1181 = vpop.f32.mrf.mxu0
        %v1182 = vadd.f32 %v1117, %v1181
        %1183 = vmatmul.f32.gmra.mxu0 %v1055
        %v1184 = vpop.f32.mrf.mxu0
        %v1185 = vadd.f32 %v1120, %v1184
        %1186 = vdwg.mxu0
        %1187 = vst.msk [vmem:[%s150] sm:$0xff] %vm888, %v1140
        %1188 = vst.msk [vmem:[%s150 + $0x8] sm:$0xff] %vm888, %v1143
        %1189 = vst.msk [vmem:[%s150 + $0x10] sm:$0xff] %vm888, %v1146
        %1190 = vst.msk [vmem:[%s150 + $0x18] sm:$0xff] %vm888, %v1149
        %1191 = vst.msk [vmem:[%s150 + $0x20] sm:$0xff] %vm888, %v1152
        %1192 = vst.msk [vmem:[%s150 + $0x28] sm:$0xff] %vm888, %v1155
        %1193 = vst.msk [vmem:[%s150 + $0x30] sm:$0xff] %vm888, %v1158
        %1194 = vst.msk [vmem:[%s150 + $0x38] sm:$0xff] %vm888, %v1161
        %1195 = vst.msk [vmem:[%s150 + $0x40] sm:$0xff] %vm888, %v1164
        %1196 = vst.msk [vmem:[%s150 + $0x48] sm:$0xff] %vm888, %v1167
        %1197 = vst.msk [vmem:[%s150 + $0x50] sm:$0xff] %vm888, %v1170
        %1198 = vst.msk [vmem:[%s150 + $0x58] sm:$0xff] %vm888, %v1173
        %1199 = vst.msk [vmem:[%s150 + $0x60] sm:$0xff] %vm888, %v1176
        %1200 = vst.msk [vmem:[%s150 + $0x68] sm:$0xff] %vm888, %v1179
        %1201 = vst.msk [vmem:[%s150 + $0x70] sm:$0xff] %vm888, %v1182
        %1202 = vst.msk [vmem:[%s150 + $0x78] sm:$0xff] %vm888, %v1185
        %s1203 = sand.u32 %s85, 1
        %s1204 = scalar_lea.sflag [#allocation3], %s1203
        %s1205 = sand.u32 %s85, 1
        %s1206 = smul.addr %s1205, 128
        %s1207 = scalar_lea.vmem [#allocation2], %s1206
        // Predicated region
        $region29: #{tpu_custom_call.1} parent=27 // pred_check
          %p1208 = pneg %p95
        $region30: #{tpu_custom_call.1} parent=27 // pred_check_branch
          %1210 = sbr.rel (%p1208) target = $region32
        $region31: #{tpu_custom_call.1} parent=27 // pred_region
          %s1211 = smul.u32 8, %s21
          %1213 = vsyncadd %s1204, 0
          %s1214 = smul.addr %s1211, 2
          %s1215 = smul.addr %s20, 32
          %s1216 = sadd.s32 %s1214, %s1215
          %s1217 = smul.addr %s1216, 8
          %s1218 = scalar_lea.hbm %s2, %s1217
          %s1219 = sshll.u32 %s1207, 4
          %s1220 = int_to_ptr.vmem [resolvable:$true] %s1219
          %s1221 = sshll.u32 %s1218, 4
          %s1222 = int_to_ptr.hbm [resolvable:$true] %s1221
          %1227 = dma.vmem_to_hbm [thread:$0]  %s1220, 2048, %s1222, %s1204, 128, 128, 8
        $region32: #{tpu_custom_call.1} parent=27 // pred_fallthru
          _
      $region28: #{tpu_custom_call.1} parent=5 // pred_fallthru
        _
      %p1228 = scmp.le.s32.totalorder 2, %s11
      // Predicated region
      $region33: #{tpu_custom_call.1} parent=5 // pred_check
        %p1229 = pneg %p1228
      $region34: #{tpu_custom_call.1} parent=5 // pred_check_branch
        %1231 = sbr.rel (%p1229) target = $region36
      $region35: #{tpu_custom_call.1} parent=5 // pred_region
        %s1232 = ssub.s32 %s11, 2
        // Predicated region
        $region37: #{tpu_custom_call.1} parent=35 // pred_check
          %p1233 = pneg %p101
        $region38: #{tpu_custom_call.1} parent=35 // pred_check_branch
          %1235 = sbr.rel (%p1233) target = $region40
        $region39: #{tpu_custom_call.1} parent=35 // pred_region
          %s1236 = sand.u32 %s86, 1
          %s1237 = scalar_lea.sflag [#allocation3], %s1236
          %s1238 = sand.u32 %s86, 1
          %s1239 = smul.addr %s1238, 128
          %s1240 = scalar_lea.vmem [#allocation2], %s1239
          %1242 = dma.done %s1237, 2048
        $region40: #{tpu_custom_call.1} parent=35 // pred_fallthru
          _
      $region36: #{tpu_custom_call.1} parent=5 // pred_fallthru
        _
    $region6: #{tpu_custom_call.1} parent=1 // loop_footer
      %s15 = sadd.s32 1, %s11
    $region7: #{tpu_custom_call.1} parent=1 // loop_footer_branch
      %10 = sbr.rel target = $region3
    $region8: #{tpu_custom_call.1} parent=1 // loop_exit
      _
    %1243 = vsyncpa [#allocation3], 1
    %s1244 = scalar_lea.sflag [#allocation3], 1
    %1245 = vsyncpa %s1244, 1

</llo_original>
